<compile_context>
chip_gen: v5e
topology: v5e:2x2
jax: 0.10.0
libtpu: 0.0.40
codegen_flags: <defaults>
</compile_context>

<pallas_src>
import functools

import jax
import jax.numpy as jnp
from jax.experimental import pallas as pl
from jax.experimental.pallas import tpu as pltpu


_LANES = 512           # lane-dense last dim (multiple of 128)
_MAX_TILE_ROWS = 1024  # 1024 * 512 * 4B = 2 MiB f32 per block (fits v5e/v6e/v7x)


def _apply_affine(z, mean, std):
    # Compile-time specialization: skip *std / +mean when they are identity.
    noise = z
    if std != 1.0:
        noise = noise * std
    if mean != 0.0:
        noise = noise + mean
    return noise


def _prng_noise_kernel(seed_ref, x_ref, o_ref, *, mean, std):
    # Seed the hardware PRNG per grid block so every tile draws independent
    # noise (required for the tiled / megacore-parallel grid to be correct).
    pltpu.prng_seed(seed_ref[0], pl.program_id(0))
    z = pltpu.stateful_normal(x_ref.shape, jnp.float32)
    noise = _apply_affine(z, mean, std)
    o_ref[...] = (x_ref[...].astype(jnp.float32) + noise).astype(o_ref.dtype)


def _add_noise_kernel(x_ref, z_ref, o_ref, *, mean, std):
    # Fallback path (non-TPU backends / interpret): noise is precomputed with
    # jax.random and the kernel does the fused scale + add.
    noise = _apply_affine(z_ref[...].astype(jnp.float32), mean, std)
    o_ref[...] = (x_ref[...].astype(jnp.float32) + noise).astype(o_ref.dtype)


def gaussian_noise(x, seed, *, mean=0.0, std=1.0, training=True):
    """Pallas equivalent of GaussianNoise.forward.

    x: any-shape float array (module uses NCHW). seed: python int controlling
    the draw. Returns x unchanged when not training or std == 0.
    """
    if (not training) or std == 0:
        return x

    mean = float(mean)
    std = float(std)
    orig_shape = x.shape
    orig_dtype = x.dtype
    total = int(x.size)

    # Flatten to a lane-dense slab, padding up to a whole number of tiles.
    rows = pl.cdiv(total, _LANES)
    tile_rows = min(_MAX_TILE_ROWS, rows)
    padded_rows = pl.cdiv(rows, tile_rows) * tile_rows
    padded_total = padded_rows * _LANES
    grid_rows = padded_rows // tile_rows

    flat = x.reshape(-1)
    if padded_total != total:
        flat = jnp.pad(flat, (0, padded_total - total))
    x2 = flat.reshape(padded_rows, _LANES)

    itemsize = jnp.dtype(orig_dtype).itemsize
    cost = pl.CostEstimate(
        flops=2 * padded_total,
        transcendentals=2 * padded_total,      # normal draw per element
        bytes_accessed=2 * padded_total * itemsize,
    )

    if jax.default_backend() == "tpu":
        kernel = functools.partial(_prng_noise_kernel, mean=mean, std=std)
        out2 = pl.pallas_call(
            kernel,
            out_shape=jax.ShapeDtypeStruct((padded_rows, _LANES), orig_dtype),
            grid_spec=pltpu.PrefetchScalarGridSpec(
                num_scalar_prefetch=1,  # seed lands in SMEM
                grid=(grid_rows,),
                in_specs=[
                    pl.BlockSpec((tile_rows, _LANES), lambda i, seed_ref: (i, 0))
                ],
                out_specs=pl.BlockSpec(
                    (tile_rows, _LANES), lambda i, seed_ref: (i, 0)
                ),
            ),
            compiler_params=pltpu.CompilerParams(
                dimension_semantics=("parallel",),  # shards tiles across TCs on v7x
            ),
            cost_estimate=cost,
        )(jnp.asarray([seed], dtype=jnp.int32), x2)
    else:
        # Non-TPU backends have no lowering for the TPU hardware PRNG
        # primitives; draw the noise outside and fuse the add in-kernel.
        z = jax.random.normal(
            jax.random.PRNGKey(int(seed)), (padded_rows, _LANES), dtype=jnp.float32
        )
        kernel = functools.partial(_add_noise_kernel, mean=mean, std=std)
        out2 = pl.pallas_call(
            kernel,
            out_shape=jax.ShapeDtypeStruct((padded_rows, _LANES), orig_dtype),
            grid=(grid_rows,),
            in_specs=[
                pl.BlockSpec((tile_rows, _LANES), lambda i: (i, 0)),
                pl.BlockSpec((tile_rows, _LANES), lambda i: (i, 0)),
            ],
            out_specs=pl.BlockSpec((tile_rows, _LANES), lambda i: (i, 0)),
        )(x2, z)

    out_flat = out2.reshape(-1)
    if padded_total != total:
        out_flat = out_flat[:total]
    return out_flat.reshape(orig_shape)


if __name__ == "__main__":
    # Deterministic small input: batch=2, channels=4, spatial=16x16 (NCHW).
    key = jax.random.PRNGKey(0)
    x = jax.random.normal(key, (2, 4, 16, 16), dtype=jnp.float32)

    # Training mode with default module params (mean=0, std=1).
    y = gaussian_noise(x, seed=0, mean=0.0, std=1.0, training=True)
    y = jax.block_until_ready(y)
    assert y.shape == x.shape and y.dtype == x.dtype

    # Eval mode (or std == 0) must be the identity, exactly like the module.
    y_eval = gaussian_noise(x, seed=0, mean=0.0, std=1.0, training=False)
    y_eval = jax.block_until_ready(y_eval)
    assert bool(jnp.all(y_eval == x))

    # Sanity: added noise should be zero-mean-ish, std-ish ~1 (loose bounds).
    diff = y - x
    m = float(jnp.mean(diff))
    s = float(jnp.std(diff))
    assert abs(m) < 0.2 and 0.7 < s < 1.3, (m, s)

    # Non-128-multiple shape exercises the padding path (no hard assert now).
    x_odd = jax.random.normal(jax.random.PRNGKey(1), (3, 5, 7, 11), jnp.float32)
    y_odd = jax.block_until_ready(
        gaussian_noise(x_odd, seed=7, mean=0.5, std=0.3, training=True)
    )
    assert y_odd.shape == x_odd.shape and y_odd.dtype == x_odd.dtype
    d_odd = y_odd - x_odd
    assert abs(float(jnp.mean(d_odd)) - 0.5) < 0.1
    assert 0.2 < float(jnp.std(d_odd)) < 0.45

    print("KERNEL_OK")
</pallas_src>

<mosaic_0001>
module attributes {stable_mosaic.version = 11 : i64} {
  func.func @_add_noise_kernel(%arg0: i32, %arg1: memref<4x512xf32, #tpu.memory_space<vmem>>, %arg2: memref<4x512xf32, #tpu.memory_space<vmem>>, %arg3: memref<4x512xf32, #tpu.memory_space<vmem>>) attributes {dimension_semantics = [#tpu.dimension_semantics<arbitrary>], iteration_bounds = array<i64: 1>, scalar_prefetch = 0 : i64, scratch_operands = 0 : i64, tpu.core_type = #tpu.core_type<tc>, window_params = [{transform_indices = @transform_0, window_bounds = array<i64: 4, 512>}, {transform_indices = @transform_1, window_bounds = array<i64: 4, 512>}, {transform_indices = @transform_2, window_bounds = array<i64: 4, 512>}]} {
    %c0 = arith.constant 0 : index
    %c0_0 = arith.constant 0 : index
    %0 = vector.load %arg2[%c0, %c0_0] : memref<4x512xf32, #tpu.memory_space<vmem>>, vector<4x512xf32>
    %c0_1 = arith.constant 0 : index
    %c0_2 = arith.constant 0 : index
    %1 = vector.load %arg1[%c0_1, %c0_2] : memref<4x512xf32, #tpu.memory_space<vmem>>, vector<4x512xf32>
    %2 = arith.addf %1, %0 : vector<4x512xf32>
    %c0_3 = arith.constant 0 : index
    %c0_4 = arith.constant 0 : index
    %3 = vector.load %arg3[%c0_3, %c0_4] : memref<4x512xf32, #tpu.memory_space<vmem>>, vector<4x512xf32>
    tpu.vector_store %arg3[%c0_3, %c0_4], %2 {strides = array<i32>} : memref<4x512xf32, #tpu.memory_space<vmem>>, vector<4x512xf32>,
    return
  }
  func.func @transform_0(%arg0: i32) -> (i32, i32) {
    %c0_i32 = arith.constant 0 : i32
    %c0_i32_0 = arith.constant 0 : i32
    return %arg0, %c0_i32 : i32, i32
  }
  func.func @transform_1(%arg0: i32) -> (i32, i32) {
    %c0_i32 = arith.constant 0 : i32
    %c0_i32_0 = arith.constant 0 : i32
    return %arg0, %c0_i32 : i32, i32
  }
  func.func @transform_2(%arg0: i32) -> (i32, i32) {
    %c0_i32 = arith.constant 0 : i32
    %c0_i32_0 = arith.constant 0 : i32
    return %arg0, %c0_i32 : i32, i32
  }
}

</mosaic_0001>

<llo_original>
// kernel: tpu_custom_call.1
$region0: #{tpu_custom_call.1}
  #allocation0 [shape = 'u32[]', space=smem, size = 0x4, offset = 0x4, fixed_abs, tag = 'smem constant byte address 0x4 - core index']
  #allocation1 [shape = 'u32[72,128]{1,0:T(1,128)}', space=vmem, size = 0x9000, scoped, tag = 'internal scratch']
  %s0 = inlined_call_operand.hbm [shape: f32[4,512], index: 0, kind: input, shape index: {}]
  %s1 = inlined_call_operand.hbm [shape: f32[4,512], index: 1, kind: input, shape index: {}]
  %s2 = inlined_call_operand.hbm [shape: f32[4,512], index: 2, kind: output, shape index: {}]
  %s3 = sld [smem:[#allocation0]]
  $region26: #{tpu_custom_call.1} parent=0
    _
  %s5 = ssub.s32 1, %s3
  %s6 = scalar_select 0, %s5, %s3
  $region1: #{tpu_custom_call.1} parent=0
    #allocation2 [shape = 'u8[8192]{0}', space=vmem, size = 0x2000, scoped, tag = 'input window, operand 0, single buffered']
    #allocation3 [shape = 's32[1]{0}', space=sflag, size = 0x4, scoped, tag = 'scoped memory for tpu_custom_call.1']
    #allocation4 [shape = 's32[1]{0}', space=sflag, size = 0x4, scoped, tag = 'scoped memory for tpu_custom_call.1']
    #allocation5 [shape = 'u8[8192]{0}', space=vmem, size = 0x2000, scoped, tag = 'input window, operand 1, single buffered']
    #allocation6 [shape = 's32[1]{0}', space=sflag, size = 0x4, scoped, tag = 'scoped memory for tpu_custom_call.1']
    #allocation7 [shape = 'u8[8192]{0}', space=vmem, size = 0x2000, scoped, tag = 'output window, operand 0, single buffered']
    %7 = vsyncpa [#allocation3], 0
    %8 = vsyncpa [#allocation6], 0
    %9 = vsyncpa [#allocation4], 0
    // Predicated region
    $region2: #{tpu_custom_call.1} parent=1 // pred_check
      _
    $region3: #{tpu_custom_call.1} parent=1 // pred_check_branch
      %11 = sbr.rel (0) target = $region5
    $region4: #{tpu_custom_call.1} parent=1 // pred_region
      %13 = vsyncadd [#allocation3], 0
      %s15 = sshll.u32 %s0, 4
      %s16 = int_to_ptr.hbm [resolvable:$true] %s15
      %s17 = sshll.u32 [#allocation2], 4
      %s18 = int_to_ptr.vmem [resolvable:$true] %s17
      %20 = dma.hbm_to_vmem [thread:$0]  %s16, 256, %s18, [#allocation3]
    $region5: #{tpu_custom_call.1} parent=1 // pred_fallthru
      _
    // Predicated region
    $region6: #{tpu_custom_call.1} parent=1 // pred_check
      _
    $region7: #{tpu_custom_call.1} parent=1 // pred_check_branch
      %22 = sbr.rel (0) target = $region9
    $region8: #{tpu_custom_call.1} parent=1 // pred_region
      %24 = vsyncadd [#allocation6], 0
      %s26 = sshll.u32 %s1, 4
      %s27 = int_to_ptr.hbm [resolvable:$true] %s26
      %s28 = sshll.u32 [#allocation5], 4
      %s29 = int_to_ptr.vmem [resolvable:$true] %s28
      %31 = dma.hbm_to_vmem [thread:$0]  %s27, 256, %s29, [#allocation6]
    $region9: #{tpu_custom_call.1} parent=1 // pred_fallthru
      _
    // Predicated region
    $region10: #{tpu_custom_call.1} parent=1 // pred_check
      _
    $region11: #{tpu_custom_call.1} parent=1 // pred_check_branch
      %33 = sbr.rel (0) target = $region13
    $region12: #{tpu_custom_call.1} parent=1 // pred_region
      %35 = dma.done [#allocation3], 256
    $region13: #{tpu_custom_call.1} parent=1 // pred_fallthru
      _
    // Predicated region
    $region14: #{tpu_custom_call.1} parent=1 // pred_check
      _
    $region15: #{tpu_custom_call.1} parent=1 // pred_check_branch
      %37 = sbr.rel (0) target = $region17
    $region16: #{tpu_custom_call.1} parent=1 // pred_region
      %39 = dma.done [#allocation6], 256
    $region17: #{tpu_custom_call.1} parent=1 // pred_fallthru
      _
    %v40 = vld [vmem:[#allocation5] sm:$0xff]
    %v41 = vld [vmem:[#allocation5 + $0x8] sm:$0xff]
    %v42 = vld [vmem:[#allocation2] sm:$0xff]
    %v43 = vld [vmem:[#allocation2 + $0x8] sm:$0xff]
    %v44 = vadd.f32 %v42, %v40
    %v45 = vadd.f32 %v43, %v41
    %46 = vst [vmem:[#allocation7] sm:$0xff] %v44
    %47 = vst [vmem:[#allocation7 + $0x8] sm:$0xff] %v45
    // Predicated region
    $region18: #{tpu_custom_call.1} parent=1 // pred_check
      _
    $region19: #{tpu_custom_call.1} parent=1 // pred_check_branch
      %49 = sbr.rel (0) target = $region21
    $region20: #{tpu_custom_call.1} parent=1 // pred_region
      %51 = vsyncadd [#allocation4], 0
      %s53 = sshll.u32 [#allocation7], 4
      %s54 = int_to_ptr.vmem [resolvable:$true] %s53
      %s55 = sshll.u32 %s2, 4
      %s56 = int_to_ptr.hbm [resolvable:$true] %s55
      %58 = dma.vmem_to_hbm [thread:$0]  %s54, 256, %s56, [#allocation4]
    $region21: #{tpu_custom_call.1} parent=1 // pred_fallthru
      _
    // Predicated region
    $region22: #{tpu_custom_call.1} parent=1 // pred_check
      _
    $region23: #{tpu_custom_call.1} parent=1 // pred_check_branch
      %60 = sbr.rel (0) target = $region25
    $region24: #{tpu_custom_call.1} parent=1 // pred_region
      %62 = dma.done [#allocation4], 256
    $region25: #{tpu_custom_call.1} parent=1 // pred_fallthru
      _
    %63 = vsyncpa [#allocation3], 1
    %64 = vsyncpa [#allocation6], 1
    %65 = vsyncpa [#allocation4], 1

</llo_original>
